<compile_context>
chip_gen: v6e
topology: v6e:2x2x1
jax: 0.10.0
libtpu: 0.0.40
codegen_flags: <defaults>
</compile_context>

<pallas_src>
import functools

import jax
import jax.numpy as jnp
from jax import lax
from jax.experimental import pallas as pl
from jax.experimental.pallas import tpu as pltpu


def _round_up(x: int, m: int) -> int:
    return (x + m - 1) // m * m


def _choose_tile(dim: int, cap: int, *, min_blocks: int = 1):
    """Largest lane-aligned tile (multiple of 128, <= cap) dividing the
    128-rounded dim.  min_blocks=2 additionally caps the tile so the padded
    dim has >= 2 blocks (keeps v7x's second TensorCore busy on the j axis)."""
    d = _round_up(dim, 128)
    eff_cap = min(cap, d)
    if min_blocks > 1 and d >= min_blocks * 128:
        eff_cap = min(eff_cap, (d // min_blocks) // 128 * 128)
    best = 128
    t = 256
    while t <= eff_cap:
        if d % t == 0:
            best = t
        t += 128
    return best, d


@functools.lru_cache(maxsize=1)
def _vmem_limit_bytes() -> int:
    default = 32 * 1024 * 1024
    try:
        info = pltpu.get_tpu_info()
        cap = getattr(info, "vmem_capacity_bytes", None)
        if cap:
            return int(min(cap * 3 // 4, 96 * 1024 * 1024))
    except Exception:
        pass
    return default


# ---------------------------------------------------------------------------
# Kernels
# ---------------------------------------------------------------------------

def _linear_kernel_acc(x_ref, w_ref, b_ref, o_ref, acc_ref):
    # x_ref: (tm, tk) activations (compute dtype)
    # w_ref: (tk, tn) pre-transposed weight tile (compute dtype)
    # b_ref: (1, tn)  f32 bias strip
    # o_ref: (tm, tn) output tile
    # acc_ref: (tm, tn) f32 accumulator, resident across the K grid axis
    k = pl.program_id(2)
    prod = jnp.dot(x_ref[...], w_ref[...], preferred_element_type=jnp.float32)

    @pl.when(k == 0)
    def _():
        acc_ref[...] = prod          # no zero-init + read-add on first step

    @pl.when(k > 0)
    def _():
        acc_ref[...] += prod

    @pl.when(k == pl.num_programs(2) - 1)
    def _():
        o_ref[...] = (acc_ref[...] + b_ref[...]).astype(o_ref.dtype)


def _linear_kernel_single(x_ref, w_ref, b_ref, o_ref):
    # Single K step: write dot + bias straight to the output (no scratch).
    o_ref[...] = (
        jnp.dot(x_ref[...], w_ref[...], preferred_element_type=jnp.float32)
        + b_ref[...]
    ).astype(o_ref.dtype)


# ---------------------------------------------------------------------------
# Parameter preparation (run ONCE per weight, outside the per-call path)
# ---------------------------------------------------------------------------

def prepare_classifier_params(weight, bias, *, param_dtype=jnp.bfloat16,
                              tn_cap=512, tk_cap=512):
    """weight: (out_features, in_features) PyTorch layout; bias: (out_features,).

    Transposes to (K, N), pads to tile multiples and casts to param_dtype once,
    so the jitted forward never touches the weight layout again."""
    n, k = weight.shape
    tn, n_pad = _choose_tile(n, tn_cap, min_blocks=2)
    tk, k_pad = _choose_tile(k, tk_cap)

    w_t = weight.T.astype(param_dtype)                    # (K, N), canonical RHS
    if (k_pad, n_pad) != (k, n):
        w_t = jnp.pad(w_t, ((0, k_pad - k), (0, n_pad - n)))
    b_row = bias.astype(jnp.float32)
    if n_pad != n:
        b_row = jnp.pad(b_row, (0, n_pad - n))
    b_row = b_row.reshape(1, n_pad)
    return w_t, b_row, (n, tn, tk)


# ---------------------------------------------------------------------------
# Forward
# ---------------------------------------------------------------------------

@functools.partial(jax.jit, static_argnames=("n", "tn", "tk", "tm_cap"))
def _forward_impl(x, w_t, b_row, *, n, tn, tk, tm_cap=256):
    B, K = x.shape
    K_pad, N_pad = w_t.shape
    compute_dtype = w_t.dtype
    out_dtype = x.dtype

    # Sublane packing: 8 rows/vreg for f32, 16 for bf16 (32 for int8/fp8).
    sub = 8 * (4 // jnp.dtype(compute_dtype).itemsize)
    tm = min(_round_up(B, sub), tm_cap)
    M_pad = _round_up(B, tm)

    x_c = x.astype(compute_dtype)
    if (M_pad, K_pad) != (B, K):
        x_c = jnp.pad(x_c, ((0, M_pad - B), (0, K_pad - K)))

    gm, gn, gk = M_pad // tm, N_pad // tn, K_pad // tk
    vmem_limit = _vmem_limit_bytes()

    if gk == 1:
        out = pl.pallas_call(
            _linear_kernel_single,
            out_shape=jax.ShapeDtypeStruct((M_pad, N_pad), out_dtype),
            grid_spec=pltpu.PrefetchScalarGridSpec(
                num_scalar_prefetch=0,
                grid=(gm, gn),
                in_specs=[
                    pl.BlockSpec((tm, tk), lambda i, j: (i, 0)),
                    pl.BlockSpec((tk, tn), lambda i, j: (0, j)),
                    pl.BlockSpec((1, tn), lambda i, j: (0, j)),
                ],
                out_specs=pl.BlockSpec((tm, tn), lambda i, j: (i, j)),
            ),
            compiler_params=pltpu.CompilerParams(
                dimension_semantics=("parallel", "parallel"),
                vmem_limit_bytes=vmem_limit,
            ),
        )(x_c, w_t, b_row)
    else:
        def _w_map(i, j, k):
            return (k, j)

        # Deeper pipelining on the dominant (weight) stream only.
        try:
            w_spec = pl.BlockSpec((tk, tn), _w_map,
                                  pipeline_mode=pl.Buffered(3))
        except TypeError:
            w_spec = pl.BlockSpec((tk, tn), _w_map)

        out = pl.pallas_call(
            _linear_kernel_acc,
            out_shape=jax.ShapeDtypeStruct((M_pad, N_pad), out_dtype),
            grid_spec=pltpu.PrefetchScalarGridSpec(
                num_scalar_prefetch=0,
                grid=(gm, gn, gk),
                in_specs=[
                    pl.BlockSpec((tm, tk), lambda i, j, k: (i, k)),
                    w_spec,
                    pl.BlockSpec((1, tn), lambda i, j, k: (0, j)),
                ],
                out_specs=pl.BlockSpec((tm, tn), lambda i, j, k: (i, j)),
                scratch_shapes=[pltpu.VMEM((tm, tn), jnp.float32)],
            ),
            compiler_params=pltpu.CompilerParams(
                dimension_semantics=("parallel", "parallel", "arbitrary"),
                vmem_limit_bytes=vmem_limit,
            ),
        )(x_c, w_t, b_row)

    if (M_pad, N_pad) != (B, n):
        out = out[:B, :n]
    return out


def classifier_forward(x, params, *, tm_cap=256):
    """Equivalent of nn.Linear(in_features, out_features)(x) with params from
    prepare_classifier_params."""
    w_t, b_row, (n, tn, tk) = params
    return _forward_impl(x, w_t, b_row, n=n, tn=tn, tk=tk, tm_cap=tm_cap)


# ---------------------------------------------------------------------------
# Self-test
# ---------------------------------------------------------------------------

def _check(key, batch, in_features, out_features, param_dtype, tol):
    k_x, k_w, k_b = jax.random.split(key, 3)
    x = jax.random.normal(k_x, (batch, in_features), dtype=jnp.float32)
    bound = 1.0 / (in_features ** 0.5)
    weight = jax.random.uniform(
        k_w, (out_features, in_features), minval=-bound, maxval=bound,
        dtype=jnp.float32)
    bias = jax.random.uniform(
        k_b, (out_features,), minval=-bound, maxval=bound, dtype=jnp.float32)

    params = prepare_classifier_params(weight, bias, param_dtype=param_dtype)
    out = jax.block_until_ready(classifier_forward(x, params))

    if jnp.dtype(param_dtype) == jnp.dtype(jnp.bfloat16):
        ref = jnp.dot(x.astype(jnp.bfloat16), weight.T.astype(jnp.bfloat16),
                      preferred_element_type=jnp.float32) + bias
    else:
        ref = jnp.dot(x, weight.T, precision=lax.Precision.HIGHEST) + bias

    assert out.shape == (batch, out_features)
    assert out.dtype == x.dtype
    err = float(jnp.max(jnp.abs(out - ref)))
    assert jnp.allclose(out, ref, atol=tol, rtol=tol), f"max abs err {err}"


if __name__ == "__main__":
    key = jax.random.PRNGKey(0)
    k1, k2, k3 = jax.random.split(key, 3)

    # Shapes implied by the module (tiny classifier head), bf16 weight stream
    # (the recommended / default path).  Exercises the single-K-step kernel.
    _check(k1, batch=8, in_features=32, out_features=16,
           param_dtype=jnp.bfloat16, tol=1e-2)

    # Larger, unaligned shapes: per-call x padding only, two N tiles
    # (megacore j axis), 5-step K accumulation, output slicing.
    _check(k2, batch=40, in_features=600, out_features=700,
           param_dtype=jnp.bfloat16, tol=1e-2)

    # Full-f32 path with tight tolerance on the same ragged shapes.
    _check(k3, batch=40, in_features=600, out_features=700,
           param_dtype=jnp.float32, tol=1e-3)

    print("KERNEL_OK")
</pallas_src>

<mosaic_0001>
module attributes {stable_mosaic.version = 11 : i64} {
  func.func @_linear_kernel_single(%arg0: i32, %arg1: i32, %arg2: memref<16x128xbf16, #tpu.memory_space<vmem>>, %arg3: memref<128x128xbf16, #tpu.memory_space<vmem>>, %arg4: memref<1x128xf32, #tpu.memory_space<vmem>>, %arg5: memref<16x128xf32, #tpu.memory_space<vmem>>) attributes {dimension_semantics = [#tpu.dimension_semantics<parallel>, #tpu.dimension_semantics<parallel>], iteration_bounds = array<i64: 1, 1>, scalar_prefetch = 0 : i64, scratch_operands = 0 : i64, tpu.core_type = #tpu.core_type<tc>, window_params = [{transform_indices = @transform_0, window_bounds = array<i64: 16, 128>}, {transform_indices = @transform_1, window_bounds = array<i64: 128, 128>}, {transform_indices = @transform_2, window_bounds = array<i64: 1, 128>}, {transform_indices = @transform_3, window_bounds = array<i64: 16, 128>}]} {
    %c0 = arith.constant 0 : index
    %c0_0 = arith.constant 0 : index
    %0 = vector.load %arg2[%c0, %c0_0] : memref<16x128xbf16, #tpu.memory_space<vmem>>, vector<16x128xbf16>
    %c0_1 = arith.constant 0 : index
    %c0_2 = arith.constant 0 : index
    %1 = vector.load %arg3[%c0_1, %c0_2] : memref<128x128xbf16, #tpu.memory_space<vmem>>, vector<128x128xbf16>
    %cst = arith.constant dense<0.000000e+00> : vector<16x128xf32>
    %2 = tpu.matmul %0, %1, %cst {dimension_numbers = #tpu.dot_dimension_numbers<[1], [0], [0], [1], [0, 0, 1, 1], [], []>} : vector<16x128xbf16>, vector<128x128xbf16>, vector<16x128xf32> -> vector<16x128xf32>
    %c0_3 = arith.constant 0 : index
    %c0_4 = arith.constant 0 : index
    %3 = vector.load %arg4[%c0_3, %c0_4] : memref<1x128xf32, #tpu.memory_space<vmem>>, vector<1x128xf32>
    %4 = vector.broadcast %3 : vector<1x128xf32> to vector<16x128xf32>
    %5 = arith.addf %2, %4 : vector<16x128xf32>
    %c0_5 = arith.constant 0 : index
    %c0_6 = arith.constant 0 : index
    %6 = vector.load %arg5[%c0_5, %c0_6] : memref<16x128xf32, #tpu.memory_space<vmem>>, vector<16x128xf32>
    tpu.vector_store %arg5[%c0_5, %c0_6], %5 {strides = array<i32>} : memref<16x128xf32, #tpu.memory_space<vmem>>, vector<16x128xf32>,
    return
  }
  func.func @transform_0(%arg0: i32, %arg1: i32) -> (i32, i32) {
    %c0_i32 = arith.constant 0 : i32
    %c0_i32_0 = arith.constant 0 : i32
    return %arg0, %c0_i32 : i32, i32
  }
  func.func @transform_1(%arg0: i32, %arg1: i32) -> (i32, i32) {
    %c0_i32 = arith.constant 0 : i32
    %c0_i32_0 = arith.constant 0 : i32
    return %c0_i32, %arg1 : i32, i32
  }
  func.func @transform_2(%arg0: i32, %arg1: i32) -> (i32, i32) {
    %c0_i32 = arith.constant 0 : i32
    %c0_i32_0 = arith.constant 0 : i32
    return %c0_i32, %arg1 : i32, i32
  }
  func.func @transform_3(%arg0: i32, %arg1: i32) -> (i32, i32) {
    %c0_i32 = arith.constant 0 : i32
    return %arg0, %arg1 : i32, i32
  }
}

</mosaic_0001>

<llo_original>
// kernel: _forward_impl.1
$region0: #{_forward_impl.1}
  #allocation0 [shape = 'u32[]', space=smem, size = 0x4, offset = 0x4, fixed_abs, tag = 'smem constant byte address 0x4 - core index']
  #allocation1 [shape = 'u32[144,128]{1,0:T(1,128)}', space=vmem, size = 0x12000, scoped, tag = 'internal scratch']
  %s0 = inlined_call_operand.vmem [shape: bf16[16,128], index: 0, kind: input, shape index: {}]
  %s1 = inlined_call_operand.hbm [shape: bf16[128,128], index: 1, kind: input, shape index: {}]
  %s2 = inlined_call_operand.vmem [shape: f32[1,128], index: 2, kind: input, shape index: {}]
  %s3 = inlined_call_operand.vmem [shape: f32[16,128], index: 3, kind: output, shape index: {}]
  %s4 = sld [smem:[#allocation0]]
  $region26: #{_forward_impl.1} parent=0
    _
  %s6 = ssub.s32 1, %s4
  %s7 = scalar_select 0, %s6, %s4
  $region1: #{_forward_impl.1} parent=0
    #allocation2 [shape = 'u8[32768]{0}', space=vmem, size = 0x8000, scoped, tag = 'input window, operand 1, single buffered']
    #allocation3 [shape = 's32[1]{0}', space=sflag, size = 0x4, scoped, tag = 'scoped memory for _forward_impl.1']
    %8 = vsyncpa [#allocation3], 0
    // Predicated region
    $region2: #{_forward_impl.1} parent=1 // pred_check
      _
    $region3: #{_forward_impl.1} parent=1 // pred_check_branch
      %10 = sbr.rel (0) target = $region5
    $region4: #{_forward_impl.1} parent=1 // pred_region
      _
    $region5: #{_forward_impl.1} parent=1 // pred_fallthru
      _
    // Predicated region
    $region6: #{_forward_impl.1} parent=1 // pred_check
      _
    $region7: #{_forward_impl.1} parent=1 // pred_check_branch
      %12 = sbr.rel (0) target = $region9
    $region8: #{_forward_impl.1} parent=1 // pred_region
      %s14 = ssub.s32 1024, 1024
      %15 = vsyncadd [#allocation3], %s14
      %s16 = sshll.u32 [#allocation2], 4
      %s17 = int_to_ptr.vmem [resolvable:$true] %s16
      %22 = dma.hbm_to_vmem [thread:$0]  %s1, 1024, %s17, [#allocation3], 64, 64, 4
    $region9: #{_forward_impl.1} parent=1 // pred_fallthru
      _
    // Predicated region
    $region10: #{_forward_impl.1} parent=1 // pred_check
      _
    $region11: #{_forward_impl.1} parent=1 // pred_check_branch
      %24 = sbr.rel (0) target = $region13
    $region12: #{_forward_impl.1} parent=1 // pred_region
      _
    $region13: #{_forward_impl.1} parent=1 // pred_fallthru
      _
    // Predicated region
    $region14: #{_forward_impl.1} parent=1 // pred_check
      _
    $region15: #{_forward_impl.1} parent=1 // pred_check_branch
      %26 = sbr.rel (0) target = $region17
    $region16: #{_forward_impl.1} parent=1 // pred_region
      %27 = dma.done [#allocation3], 1024
    $region17: #{_forward_impl.1} parent=1 // pred_fallthru
      _
    %v29 = vld [vmem:[%s0] sm:$0xf]
    %v30 = vld [vmem:[%s0 + $0x4] sm:$0xf]
    %v31 = vld [vmem:[#allocation2] sm:$0xf]
    %v32 = vld [vmem:[#allocation2 + $0x4] sm:$0xf]
    %v33 = vld [vmem:[#allocation2 + $0x8] sm:$0xf]
    %v34 = vld [vmem:[#allocation2 + $0xc] sm:$0xf]
    %v35 = vld [vmem:[#allocation2 + $0x10] sm:$0xf]
    %v36 = vld [vmem:[#allocation2 + $0x14] sm:$0xf]
    %v37 = vld [vmem:[#allocation2 + $0x18] sm:$0xf]
    %v38 = vld [vmem:[#allocation2 + $0x1c] sm:$0xf]
    %v39 = vld [vmem:[#allocation2 + $0x20] sm:$0xf]
    %v40 = vld [vmem:[#allocation2 + $0x24] sm:$0xf]
    %v41 = vld [vmem:[#allocation2 + $0x28] sm:$0xf]
    %v42 = vld [vmem:[#allocation2 + $0x2c] sm:$0xf]
    %v43 = vld [vmem:[#allocation2 + $0x30] sm:$0xf]
    %v44 = vld [vmem:[#allocation2 + $0x34] sm:$0xf]
    %v45 = vld [vmem:[#allocation2 + $0x38] sm:$0xf]
    %v46 = vld [vmem:[#allocation2 + $0x3c] sm:$0xf]
    %v47 = vld [vmem:[%s2] sm:$0x1]
    %v49 = vlaneseq
    %v50 = vshrl.u32 %v49, 7
    %v51 = vsub.s32 0, %v50
    %v52 = vrot.slane %v47, %v51
    %v56 = vunpack.c.l.b16 %v29
    %v57 = vunpack.c.l.b16 %v30
    %v58 = vpack.c.b16 %v57, %v56
    %v76 = vunpack.c.l.b16 %v31
    %v77 = vunpack.c.l.b16 %v32
    %v78 = vunpack.c.l.b16 %v33
    %v79 = vunpack.c.l.b16 %v34
    %v80 = vunpack.c.l.b16 %v35
    %v81 = vunpack.c.l.b16 %v36
    %v82 = vunpack.c.l.b16 %v37
    %v83 = vunpack.c.l.b16 %v38
    %v84 = vunpack.c.l.b16 %v39
    %v85 = vunpack.c.l.b16 %v40
    %v86 = vunpack.c.l.b16 %v41
    %v87 = vunpack.c.l.b16 %v42
    %v88 = vunpack.c.l.b16 %v43
    %v89 = vunpack.c.l.b16 %v44
    %v90 = vunpack.c.l.b16 %v45
    %v91 = vunpack.c.l.b16 %v46
    %v92 = vpack.c.b16 %v77, %v76
    %v93 = vpack.c.b16 %v79, %v78
    %v94 = vpack.c.b16 %v81, %v80
    %v95 = vpack.c.b16 %v83, %v82
    %v96 = vpack.c.b16 %v85, %v84
    %v97 = vpack.c.b16 %v87, %v86
    %v98 = vpack.c.b16 %v89, %v88
    %v99 = vpack.c.b16 %v91, %v90
    %108 = vmatprep.subr.bf16.mxu0 0
    %109 = vmatpush1.bf16.msra.mxu0 %v99
    %110 = vmatprep.subr.bf16.mxu0 0
    %111 = vmatpush1.bf16.msra.mxu0 %v98
    %112 = vmatprep.subr.bf16.mxu0 0
    %113 = vmatpush1.bf16.msra.mxu0 %v97
    %114 = vmatprep.subr.bf16.mxu0 0
    %115 = vmatpush1.bf16.msra.mxu0 %v96
    %116 = vmatprep.subr.bf16.mxu0 0
    %117 = vmatpush1.bf16.msra.mxu0 %v95
    %118 = vmatprep.subr.bf16.mxu0 0
    %119 = vmatpush1.bf16.msra.mxu0 %v94
    %120 = vmatprep.subr.bf16.mxu0 0
    %121 = vmatpush1.bf16.msra.mxu0 %v93
    %122 = vmatprep.subr.bf16.mxu0 0
    %123 = vmatpush1.bf16.msra.mxu0 %v92
    %124 = vmatprep.subr.bf16.mxu0 0
    %125 = vmatpush2.bf16.msra.mxu0 0
    %126 = vmatprep.subr.bf16.mxu0 0
    %127 = vmatpush2.bf16.msra.mxu0 0
    %128 = vmatprep.subr.bf16.mxu0 0
    %129 = vmatpush2.bf16.msra.mxu0 0
    %130 = vmatprep.subr.bf16.mxu0 0
    %131 = vmatpush2.bf16.msra.mxu0 0
    %132 = vmatprep.subr.bf16.mxu0 0
    %133 = vmatpush2.bf16.msra.mxu0 0
    %134 = vmatprep.subr.bf16.mxu0 0
    %135 = vmatpush2.bf16.msra.mxu0 0
    %136 = vmatprep.subr.bf16.mxu0 0
    %137 = vmatpush2.bf16.msra.mxu0 0
    %138 = vmatprep.subr.bf16.mxu0 0
    %139 = vmatpush2.bf16.msra.mxu0 0
    %140 = vmatprep.mubr.bf16.mxu0 0
    %141 = vmatmul.mubr.bf16.gmra.mxu0 %v58
    %v142 = vpop.f32.mrf.mxu0
    %v143 = vadd.f32 %v52, %v142
    %v144 = vpop.f32.mrf.mxu0
    %v145 = vpop.f32.mrf.mxu0
    %v146 = vadd.f32 %v52, %v145
    %v147 = vpop.f32.mrf.mxu0
    %148 = vdwg.mxu0
    %149 = vst [vmem:[%s3] sm:$0xff] %v143
    %150 = vst [vmem:[%s3 + $0x8] sm:$0xff] %v146
    // Predicated region
    $region18: #{_forward_impl.1} parent=1 // pred_check
      _
    $region19: #{_forward_impl.1} parent=1 // pred_check_branch
      %152 = sbr.rel (0) target = $region21
    $region20: #{_forward_impl.1} parent=1 // pred_region
      _
    $region21: #{_forward_impl.1} parent=1 // pred_fallthru
      _
    // Predicated region
    $region22: #{_forward_impl.1} parent=1 // pred_check
      _
    $region23: #{_forward_impl.1} parent=1 // pred_check_branch
      %154 = sbr.rel (0) target = $region25
    $region24: #{_forward_impl.1} parent=1 // pred_region
      _
    $region25: #{_forward_impl.1} parent=1 // pred_fallthru
      _
    %155 = vsyncpa [#allocation3], 1

</llo_original>
